<compile_context>
chip_gen: v7x
topology: tpu7x:2x2x1
jax: 0.10.0
libtpu: 0.0.40
codegen_flags: <defaults>
</compile_context>

<pallas_src>
import functools

import jax
import jax.numpy as jnp
from jax.experimental import pallas as pl
from jax.experimental.pallas import tpu as pltpu


def _round_up(x, m):
    return (x + m - 1) // m * m


def _conv1d_kernel(w_ref, x_ref, o_ref, *, C, K, pad, Lp):
    # w_ref: (C, K)      f32 in SMEM (scalar taps)
    # x_ref: (C, NB, Lp) f32 in VMEM (length zero-padded to Lp lanes)
    # o_ref: (NB, Lp)    f32 in VMEM (lane/sublane dense output block)
    acc = jnp.zeros(o_ref.shape, jnp.float32)
    for c in range(C):
        xc = x_ref[c]                                   # (NB, Lp) full vregs
        for k in range(K):
            shift = (pad - k) % Lp                      # static python int
            shifted = pltpu.roll(xc, shift=shift, axis=1) if shift else xc
            # Out-of-range taps wrap into the zero-padded lane region, which
            # reproduces the conv's zero padding exactly (Lp >= L + pad).
            acc = acc + w_ref[c, k] * shifted           # scalar * vreg FMA (VPU)
    o_ref[...] = acc.astype(o_ref.dtype)


def conv1d_pallas(x, weight):
    """x: (N, C, L), weight: (1, C, K) -> (N, 1, L_out), matching
    torch.nn.Conv1d(C, 1, K, stride=1, padding=K//2, bias=False)."""
    N, C, L = x.shape
    OC, Cw, K = weight.shape
    assert OC == 1 and Cw == C
    pad = K // 2
    L_out = L + 2 * pad - K + 1          # == L for odd K

    NB = 8                                # batch rows per block = sublanes/vreg
    N_pad = _round_up(max(N, 1), NB)
    # Lane-dense length; also >= L + pad so rolled out-of-range taps hit zeros.
    Lp = _round_up(max(L + pad, L_out, 1), 128)

    # Layout plumbing (single pass): (N, C, L) -> (C, N_pad, Lp), zero padded.
    xt = jnp.transpose(x, (1, 0, 2))
    xt = jnp.pad(xt, ((0, 0), (0, N_pad - N), (0, Lp - L)))
    w2 = weight.reshape(C, K).astype(jnp.float32)

    kernel = functools.partial(_conv1d_kernel, C=C, K=K, pad=pad, Lp=Lp)

    out = pl.pallas_call(
        kernel,
        out_shape=jax.ShapeDtypeStruct((N_pad, Lp), x.dtype),
        grid_spec=pltpu.PrefetchScalarGridSpec(
            num_scalar_prefetch=0,
            grid=(N_pad // NB,),
            in_specs=[
                pl.BlockSpec(memory_space=pltpu.MemorySpace.SMEM),   # weights
                pl.BlockSpec((C, NB, Lp), lambda n: (0, n, 0)),      # input slab
            ],
            out_specs=pl.BlockSpec((NB, Lp), lambda n: (n, 0)),
        ),
        compiler_params=pltpu.CompilerParams(
            dimension_semantics=("parallel",)),
    )(w2, xt)

    return out[:N, :L_out].reshape(N, 1, L_out)


def conv1d_reference(x, weight):
    """Pure-JAX reference matching torch.nn.Conv1d(..., padding=K//2, bias=False)."""
    K = weight.shape[2]
    return jax.lax.conv_general_dilated(
        x, weight,
        window_strides=(1,),
        padding=[(K // 2, K // 2)],
        dimension_numbers=("NCH", "OIH", "NCH"),
    )


if __name__ == "__main__":
    key = jax.random.PRNGKey(0)
    kx, kw = jax.random.split(key)

    # Shapes implied by the module: np_weights (1, C, K), input x (N, C, L).
    N, C, L, K = 2, 4, 16, 5
    x = jax.random.normal(kx, (N, C, L), dtype=jnp.float32)
    np_weights = jax.random.normal(kw, (1, C, K), dtype=jnp.float32)

    out = jax.block_until_ready(conv1d_pallas(x, np_weights))
    ref = conv1d_reference(x, np_weights)
    assert out.shape == ref.shape == (N, 1, L)
    assert jnp.allclose(out, ref, atol=1e-4, rtol=1e-4), "mismatch vs reference"

    # Second config exercises batch padding (N % 8 != 0) and a different K.
    N2, C2, L2, K2 = 3, 3, 20, 3
    x2 = jax.random.normal(kx, (N2, C2, L2), dtype=jnp.float32)
    w2 = jax.random.normal(kw, (1, C2, K2), dtype=jnp.float32)
    out2 = jax.block_until_ready(conv1d_pallas(x2, w2))
    ref2 = conv1d_reference(x2, w2)
    assert out2.shape == ref2.shape
    assert jnp.allclose(out2, ref2, atol=1e-4, rtol=1e-4), "mismatch (cfg2)"

    print("KERNEL_OK")
</pallas_src>

<mosaic_0001>
module attributes {stable_mosaic.version = 11 : i64} {
  func.func @_conv1d_kernel(%arg0: i32, %arg1: memref<4x5xf32, #tpu.memory_space<smem>>, %arg2: memref<4x8x128xf32, #tpu.memory_space<vmem>>, %arg3: memref<8x128xf32, #tpu.memory_space<vmem>>) attributes {dimension_semantics = [#tpu.dimension_semantics<parallel>], iteration_bounds = array<i64: 1>, scalar_prefetch = 0 : i64, scratch_operands = 0 : i64, tpu.core_type = #tpu.core_type<tc>, window_params = [{transform_indices = @transform_0, window_bounds = array<i64: 4, 5>}, {transform_indices = @transform_1, window_bounds = array<i64: 4, 8, 128>}, {transform_indices = @transform_2, window_bounds = array<i64: 8, 128>}]} {
    %cst = arith.constant 0.000000e+00 : f32
    %0 = vector.broadcast %cst : f32 to vector<8x128xf32>
    %c0 = arith.constant 0 : index
    %c0_0 = arith.constant 0 : index
    %c0_1 = arith.constant 0 : index
    %1 = vector.load %arg2[%c0, %c0_0, %c0_1] : memref<4x8x128xf32, #tpu.memory_space<vmem>>, vector<1x8x128xf32>
    %2 = vector.shape_cast %1 : vector<1x8x128xf32> to vector<8x128xf32>
    %c2_i32 = arith.constant 2 : i32
    %3 = tpu.dynamic_rotate %2 by %c2_i32 dim 1 : vector<8x128xf32>, i32 -> vector<8x128xf32>
    %c0_2 = arith.constant 0 : index
    %c0_3 = arith.constant 0 : index
    %4 = memref.load %arg1[%c0_2, %c0_3] : memref<4x5xf32, #tpu.memory_space<smem>>
    %5 = vector.broadcast %4 : f32 to vector<8x128xf32>
    %6 = arith.mulf %5, %3 : vector<8x128xf32>
    %7 = arith.addf %0, %6 : vector<8x128xf32>
    %c1_i32 = arith.constant 1 : i32
    %8 = tpu.dynamic_rotate %2 by %c1_i32 dim 1 : vector<8x128xf32>, i32 -> vector<8x128xf32>
    %c0_4 = arith.constant 0 : index
    %c1 = arith.constant 1 : index
    %9 = memref.load %arg1[%c0_4, %c1] : memref<4x5xf32, #tpu.memory_space<smem>>
    %10 = vector.broadcast %9 : f32 to vector<8x128xf32>
    %11 = arith.mulf %10, %8 : vector<8x128xf32>
    %12 = arith.addf %7, %11 : vector<8x128xf32>
    %c0_5 = arith.constant 0 : index
    %c2 = arith.constant 2 : index
    %13 = memref.load %arg1[%c0_5, %c2] : memref<4x5xf32, #tpu.memory_space<smem>>
    %14 = vector.broadcast %13 : f32 to vector<8x128xf32>
    %15 = arith.mulf %14, %2 : vector<8x128xf32>
    %16 = arith.addf %12, %15 : vector<8x128xf32>
    %c127_i32 = arith.constant 127 : i32
    %17 = tpu.dynamic_rotate %2 by %c127_i32 dim 1 : vector<8x128xf32>, i32 -> vector<8x128xf32>
    %c0_6 = arith.constant 0 : index
    %c3 = arith.constant 3 : index
    %18 = memref.load %arg1[%c0_6, %c3] : memref<4x5xf32, #tpu.memory_space<smem>>
    %19 = vector.broadcast %18 : f32 to vector<8x128xf32>
    %20 = arith.mulf %19, %17 : vector<8x128xf32>
    %21 = arith.addf %16, %20 : vector<8x128xf32>
    %c126_i32 = arith.constant 126 : i32
    %22 = tpu.dynamic_rotate %2 by %c126_i32 dim 1 : vector<8x128xf32>, i32 -> vector<8x128xf32>
    %c0_7 = arith.constant 0 : index
    %c4 = arith.constant 4 : index
    %23 = memref.load %arg1[%c0_7, %c4] : memref<4x5xf32, #tpu.memory_space<smem>>
    %24 = vector.broadcast %23 : f32 to vector<8x128xf32>
    %25 = arith.mulf %24, %22 : vector<8x128xf32>
    %26 = arith.addf %21, %25 : vector<8x128xf32>
    %c1_8 = arith.constant 1 : index
    %c0_9 = arith.constant 0 : index
    %c0_10 = arith.constant 0 : index
    %27 = vector.load %arg2[%c1_8, %c0_9, %c0_10] : memref<4x8x128xf32, #tpu.memory_space<vmem>>, vector<1x8x128xf32>
    %28 = vector.shape_cast %27 : vector<1x8x128xf32> to vector<8x128xf32>
    %c2_i32_11 = arith.constant 2 : i32
    %29 = tpu.dynamic_rotate %28 by %c2_i32_11 dim 1 : vector<8x128xf32>, i32 -> vector<8x128xf32>
    %c1_12 = arith.constant 1 : index
    %c0_13 = arith.constant 0 : index
    %30 = memref.load %arg1[%c1_12, %c0_13] : memref<4x5xf32, #tpu.memory_space<smem>>
    %31 = vector.broadcast %30 : f32 to vector<8x128xf32>
    %32 = arith.mulf %31, %29 : vector<8x128xf32>
    %33 = arith.addf %26, %32 : vector<8x128xf32>
    %c1_i32_14 = arith.constant 1 : i32
    %34 = tpu.dynamic_rotate %28 by %c1_i32_14 dim 1 : vector<8x128xf32>, i32 -> vector<8x128xf32>
    %c1_15 = arith.constant 1 : index
    %c1_16 = arith.constant 1 : index
    %35 = memref.load %arg1[%c1_15, %c1_16] : memref<4x5xf32, #tpu.memory_space<smem>>
    %36 = vector.broadcast %35 : f32 to vector<8x128xf32>
    %37 = arith.mulf %36, %34 : vector<8x128xf32>
    %38 = arith.addf %33, %37 : vector<8x128xf32>
    %c1_17 = arith.constant 1 : index
    %c2_18 = arith.constant 2 : index
    %39 = memref.load %arg1[%c1_17, %c2_18] : memref<4x5xf32, #tpu.memory_space<smem>>
    %40 = vector.broadcast %39 : f32 to vector<8x128xf32>
    %41 = arith.mulf %40, %28 : vector<8x128xf32>
    %42 = arith.addf %38, %41 : vector<8x128xf32>
    %c127_i32_19 = arith.constant 127 : i32
    %43 = tpu.dynamic_rotate %28 by %c127_i32_19 dim 1 : vector<8x128xf32>, i32 -> vector<8x128xf32>
    %c1_20 = arith.constant 1 : index
    %c3_21 = arith.constant 3 : index
    %44 = memref.load %arg1[%c1_20, %c3_21] : memref<4x5xf32, #tpu.memory_space<smem>>
    %45 = vector.broadcast %44 : f32 to vector<8x128xf32>
    %46 = arith.mulf %45, %43 : vector<8x128xf32>
    %47 = arith.addf %42, %46 : vector<8x128xf32>
    %c126_i32_22 = arith.constant 126 : i32
    %48 = tpu.dynamic_rotate %28 by %c126_i32_22 dim 1 : vector<8x128xf32>, i32 -> vector<8x128xf32>
    %c1_23 = arith.constant 1 : index
    %c4_24 = arith.constant 4 : index
    %49 = memref.load %arg1[%c1_23, %c4_24] : memref<4x5xf32, #tpu.memory_space<smem>>
    %50 = vector.broadcast %49 : f32 to vector<8x128xf32>
    %51 = arith.mulf %50, %48 : vector<8x128xf32>
    %52 = arith.addf %47, %51 : vector<8x128xf32>
    %c2_25 = arith.constant 2 : index
    %c0_26 = arith.constant 0 : index
    %c0_27 = arith.constant 0 : index
    %53 = vector.load %arg2[%c2_25, %c0_26, %c0_27] : memref<4x8x128xf32, #tpu.memory_space<vmem>>, vector<1x8x128xf32>
    %54 = vector.shape_cast %53 : vector<1x8x128xf32> to vector<8x128xf32>
    %c2_i32_28 = arith.constant 2 : i32
    %55 = tpu.dynamic_rotate %54 by %c2_i32_28 dim 1 : vector<8x128xf32>, i32 -> vector<8x128xf32>
    %c2_29 = arith.constant 2 : index
    %c0_30 = arith.constant 0 : index
    %56 = memref.load %arg1[%c2_29, %c0_30] : memref<4x5xf32, #tpu.memory_space<smem>>
    %57 = vector.broadcast %56 : f32 to vector<8x128xf32>
    %58 = arith.mulf %57, %55 : vector<8x128xf32>
    %59 = arith.addf %52, %58 : vector<8x128xf32>
    %c1_i32_31 = arith.constant 1 : i32
    %60 = tpu.dynamic_rotate %54 by %c1_i32_31 dim 1 : vector<8x128xf32>, i32 -> vector<8x128xf32>
    %c2_32 = arith.constant 2 : index
    %c1_33 = arith.constant 1 : index
    %61 = memref.load %arg1[%c2_32, %c1_33] : memref<4x5xf32, #tpu.memory_space<smem>>
    %62 = vector.broadcast %61 : f32 to vector<8x128xf32>
    %63 = arith.mulf %62, %60 : vector<8x128xf32>
    %64 = arith.addf %59, %63 : vector<8x128xf32>
    %c2_34 = arith.constant 2 : index
    %c2_35 = arith.constant 2 : index
    %65 = memref.load %arg1[%c2_34, %c2_35] : memref<4x5xf32, #tpu.memory_space<smem>>
    %66 = vector.broadcast %65 : f32 to vector<8x128xf32>
    %67 = arith.mulf %66, %54 : vector<8x128xf32>
    %68 = arith.addf %64, %67 : vector<8x128xf32>
    %c127_i32_36 = arith.constant 127 : i32
    %69 = tpu.dynamic_rotate %54 by %c127_i32_36 dim 1 : vector<8x128xf32>, i32 -> vector<8x128xf32>
    %c2_37 = arith.constant 2 : index
    %c3_38 = arith.constant 3 : index
    %70 = memref.load %arg1[%c2_37, %c3_38] : memref<4x5xf32, #tpu.memory_space<smem>>
    %71 = vector.broadcast %70 : f32 to vector<8x128xf32>
    %72 = arith.mulf %71, %69 : vector<8x128xf32>
    %73 = arith.addf %68, %72 : vector<8x128xf32>
    %c126_i32_39 = arith.constant 126 : i32
    %74 = tpu.dynamic_rotate %54 by %c126_i32_39 dim 1 : vector<8x128xf32>, i32 -> vector<8x128xf32>
    %c2_40 = arith.constant 2 : index
    %c4_41 = arith.constant 4 : index
    %75 = memref.load %arg1[%c2_40, %c4_41] : memref<4x5xf32, #tpu.memory_space<smem>>
    %76 = vector.broadcast %75 : f32 to vector<8x128xf32>
    %77 = arith.mulf %76, %74 : vector<8x128xf32>
    %78 = arith.addf %73, %77 : vector<8x128xf32>
    %c3_42 = arith.constant 3 : index
    %c0_43 = arith.constant 0 : index
    %c0_44 = arith.constant 0 : index
    %79 = vector.load %arg2[%c3_42, %c0_43, %c0_44] : memref<4x8x128xf32, #tpu.memory_space<vmem>>, vector<1x8x128xf32>
    %80 = vector.shape_cast %79 : vector<1x8x128xf32> to vector<8x128xf32>
    %c2_i32_45 = arith.constant 2 : i32
    %81 = tpu.dynamic_rotate %80 by %c2_i32_45 dim 1 : vector<8x128xf32>, i32 -> vector<8x128xf32>
    %c3_46 = arith.constant 3 : index
    %c0_47 = arith.constant 0 : index
    %82 = memref.load %arg1[%c3_46, %c0_47] : memref<4x5xf32, #tpu.memory_space<smem>>
    %83 = vector.broadcast %82 : f32 to vector<8x128xf32>
    %84 = arith.mulf %83, %81 : vector<8x128xf32>
    %85 = arith.addf %78, %84 : vector<8x128xf32>
    %c1_i32_48 = arith.constant 1 : i32
    %86 = tpu.dynamic_rotate %80 by %c1_i32_48 dim 1 : vector<8x128xf32>, i32 -> vector<8x128xf32>
    %c3_49 = arith.constant 3 : index
    %c1_50 = arith.constant 1 : index
    %87 = memref.load %arg1[%c3_49, %c1_50] : memref<4x5xf32, #tpu.memory_space<smem>>
    %88 = vector.broadcast %87 : f32 to vector<8x128xf32>
    %89 = arith.mulf %88, %86 : vector<8x128xf32>
    %90 = arith.addf %85, %89 : vector<8x128xf32>
    %c3_51 = arith.constant 3 : index
    %c2_52 = arith.constant 2 : index
    %91 = memref.load %arg1[%c3_51, %c2_52] : memref<4x5xf32, #tpu.memory_space<smem>>
    %92 = vector.broadcast %91 : f32 to vector<8x128xf32>
    %93 = arith.mulf %92, %80 : vector<8x128xf32>
    %94 = arith.addf %90, %93 : vector<8x128xf32>
    %c127_i32_53 = arith.constant 127 : i32
    %95 = tpu.dynamic_rotate %80 by %c127_i32_53 dim 1 : vector<8x128xf32>, i32 -> vector<8x128xf32>
    %c3_54 = arith.constant 3 : index
    %c3_55 = arith.constant 3 : index
    %96 = memref.load %arg1[%c3_54, %c3_55] : memref<4x5xf32, #tpu.memory_space<smem>>
    %97 = vector.broadcast %96 : f32 to vector<8x128xf32>
    %98 = arith.mulf %97, %95 : vector<8x128xf32>
    %99 = arith.addf %94, %98 : vector<8x128xf32>
    %c126_i32_56 = arith.constant 126 : i32
    %100 = tpu.dynamic_rotate %80 by %c126_i32_56 dim 1 : vector<8x128xf32>, i32 -> vector<8x128xf32>
    %c3_57 = arith.constant 3 : index
    %c4_58 = arith.constant 4 : index
    %101 = memref.load %arg1[%c3_57, %c4_58] : memref<4x5xf32, #tpu.memory_space<smem>>
    %102 = vector.broadcast %101 : f32 to vector<8x128xf32>
    %103 = arith.mulf %102, %100 : vector<8x128xf32>
    %104 = arith.addf %99, %103 : vector<8x128xf32>
    %c0_59 = arith.constant 0 : index
    %c0_60 = arith.constant 0 : index
    %105 = vector.load %arg3[%c0_59, %c0_60] : memref<8x128xf32, #tpu.memory_space<vmem>>, vector<8x128xf32>
    tpu.vector_store %arg3[%c0_59, %c0_60], %104 {strides = array<i32>} : memref<8x128xf32, #tpu.memory_space<vmem>>, vector<8x128xf32>,
    return
  }
  func.func @transform_0(%arg0: i32) -> (i32, i32) {
    %c0_i32 = arith.constant 0 : i32
    %c0_i32_0 = arith.constant 0 : i32
    %c0_i32_1 = arith.constant 0 : i32
    return %c0_i32, %c0_i32_0 : i32, i32
  }
  func.func @transform_1(%arg0: i32) -> (i32, i32, i32) {
    %c0_i32 = arith.constant 0 : i32
    %c0_i32_0 = arith.constant 0 : i32
    %c0_i32_1 = arith.constant 0 : i32
    return %c0_i32, %arg0, %c0_i32_0 : i32, i32, i32
  }
  func.func @transform_2(%arg0: i32) -> (i32, i32) {
    %c0_i32 = arith.constant 0 : i32
    %c0_i32_0 = arith.constant 0 : i32
    return %arg0, %c0_i32 : i32, i32
  }
}

</mosaic_0001>

<llo_original>
// kernel: tpu_custom_call.1
$region0: #{tpu_custom_call.1}
  #allocation0 [shape = 'u32[]', space=smem, size = 0x4, offset = 0x4, fixed_abs, tag = 'smem constant byte address 0x4 - core index']
  #allocation1 [shape = 'u32[144,128]{1,0:T(1,128)}', space=vmem, size = 0x12000, scoped, tag = 'internal scratch']
  %s0 = inlined_call_operand.hbm [shape: f32[4,5], index: 0, kind: input, shape index: {}]
  %s1 = inlined_call_operand.hbm [shape: f32[4,8,128], index: 1, kind: input, shape index: {}]
  %s2 = inlined_call_operand.hbm [shape: f32[8,128], index: 2, kind: output, shape index: {}]
  %s3 = sld [smem:[#allocation0]]
  $region26: #{tpu_custom_call.1} parent=0
    _
  %s5 = ssub.s32 1, %s3
  %s6 = scalar_select 0, %s5, %s3
  $region1: #{tpu_custom_call.1} parent=0
    #allocation2 [shape = 'u8[2048]{0}', space=smem, size = 0x800, scoped, tag = 'input window, operand 0, single buffered']
    #allocation3 [shape = 's32[1]{0}', space=sflag, size = 0x4, scoped, tag = 'scoped memory for tpu_custom_call.1']
    #allocation4 [shape = 's32[1]{0}', space=sflag, size = 0x4, scoped, tag = 'scoped memory for tpu_custom_call.1']
    #allocation5 [shape = 's32[1]{0}', space=sflag, size = 0x4, scoped, tag = 'scoped memory for tpu_custom_call.1']
    #allocation6 [shape = 'u8[16384]{0}', space=vmem, size = 0x4000, scoped, tag = 'input window, operand 1, single buffered']
    #allocation7 [shape = 'u8[4096]{0}', space=vmem, size = 0x1000, scoped, tag = 'output window, operand 0, single buffered']
    %7 = vsyncpa [#allocation5], 0
    %8 = vsyncpa [#allocation3], 0
    %9 = vsyncpa [#allocation4], 0
    // Predicated region
    $region2: #{tpu_custom_call.1} parent=1 // pred_check
      _
    $region3: #{tpu_custom_call.1} parent=1 // pred_check_branch
      %11 = sbr.rel (0) target = $region5
    $region4: #{tpu_custom_call.1} parent=1 // pred_region
      %s13 = ssub.s32 64, 64
      %14 = vsyncadd [#allocation5], %s13
      %17 = dma.hbm_to_smem %s0, 64, [#allocation2], [#allocation5]
    $region5: #{tpu_custom_call.1} parent=1 // pred_fallthru
      _
    // Predicated region
    $region6: #{tpu_custom_call.1} parent=1 // pred_check
      _
    $region7: #{tpu_custom_call.1} parent=1 // pred_check_branch
      %19 = sbr.rel (0) target = $region9
    $region8: #{tpu_custom_call.1} parent=1 // pred_region
      %s21 = ssub.s32 512, 512
      %22 = vsyncadd [#allocation3], %s21
      %s23 = sshll.u32 [#allocation6], 4
      %s24 = int_to_ptr.vmem [resolvable:$true] %s23
      %29 = dma.hbm_to_vmem [thread:$0]  %s1, 512, %s24, [#allocation3], 128, 128, 8
    $region9: #{tpu_custom_call.1} parent=1 // pred_fallthru
      _
    // Predicated region
    $region10: #{tpu_custom_call.1} parent=1 // pred_check
      _
    $region11: #{tpu_custom_call.1} parent=1 // pred_check_branch
      %31 = sbr.rel (0) target = $region13
    $region12: #{tpu_custom_call.1} parent=1 // pred_region
      %32 = dma.done [#allocation5], 64
    $region13: #{tpu_custom_call.1} parent=1 // pred_fallthru
      _
    // Predicated region
    $region14: #{tpu_custom_call.1} parent=1 // pred_check
      _
    $region15: #{tpu_custom_call.1} parent=1 // pred_check_branch
      %34 = sbr.rel (0) target = $region17
    $region16: #{tpu_custom_call.1} parent=1 // pred_region
      %35 = dma.done [#allocation3], 512
    $region17: #{tpu_custom_call.1} parent=1 // pred_fallthru
      _
    %36 = sfence
    %v37 = vld [vmem:[#allocation6] sm:$0xff]
    %38 = vrot.lane.b32.xlu0 %v37, 2
    %v39 = vpop.permute.xlu0 %38
    %s40 = sld [smem:[#allocation2]]
    %v41 = vstv %s40
    %v42 = vmul.f32 %v41, %v39
    %v43 = vadd.f32 %v42, 0.0
    %44 = vrot.lane.b32.xlu0 %v37, 1
    %v45 = vpop.permute.xlu0 %44
    %s46 = sld [smem:[#allocation2 + $0x1]]
    %v47 = vstv %s46
    %v48 = vmul.f32 %v47, %v45
    %v49 = vadd.f32 %v43, %v48
    %s50 = sld [smem:[#allocation2 + $0x2]]
    %v51 = vstv %s50
    %v52 = vmul.f32 %v51, %v37
    %v53 = vadd.f32 %v49, %v52
    %54 = vrot.lane.b32.xlu0 %v37, 127
    %v55 = vpop.permute.xlu0 %54
    %s56 = sld [smem:[#allocation2 + $0x3]]
    %v57 = vstv %s56
    %v58 = vmul.f32 %v57, %v55
    %v59 = vadd.f32 %v53, %v58
    %60 = vrot.lane.b32.xlu0 %v37, 126
    %v61 = vpop.permute.xlu0 %60
    %s62 = sld [smem:[#allocation2 + $0x4]]
    %v63 = vstv %s62
    %v64 = vmul.f32 %v63, %v61
    %v65 = vadd.f32 %v59, %v64
    %s66 = scalar_lea.vmem [#allocation6], 8
    %v67 = vld [vmem:[%s66] sm:$0xff]
    %68 = vrot.lane.b32.xlu0 %v67, 2
    %v69 = vpop.permute.xlu0 %68
    %s70 = sld [smem:[#allocation2 + $0x80]]
    %v71 = vstv %s70
    %v72 = vmul.f32 %v71, %v69
    %v73 = vadd.f32 %v65, %v72
    %74 = vrot.lane.b32.xlu0 %v67, 1
    %v75 = vpop.permute.xlu0 %74
    %s76 = sld [smem:[#allocation2 + $0x81]]
    %v77 = vstv %s76
    %v78 = vmul.f32 %v77, %v75
    %v79 = vadd.f32 %v73, %v78
    %s80 = sld [smem:[#allocation2 + $0x82]]
    %v81 = vstv %s80
    %v82 = vmul.f32 %v81, %v67
    %v83 = vadd.f32 %v79, %v82
    %84 = vrot.lane.b32.xlu0 %v67, 127
    %v85 = vpop.permute.xlu0 %84
    %s86 = sld [smem:[#allocation2 + $0x83]]
    %v87 = vstv %s86
    %v88 = vmul.f32 %v87, %v85
    %v89 = vadd.f32 %v83, %v88
    %90 = vrot.lane.b32.xlu0 %v67, 126
    %v91 = vpop.permute.xlu0 %90
    %s92 = sld [smem:[#allocation2 + $0x84]]
    %v93 = vstv %s92
    %v94 = vmul.f32 %v93, %v91
    %v95 = vadd.f32 %v89, %v94
    %s96 = scalar_lea.vmem [#allocation6], 16
    %v97 = vld [vmem:[%s96] sm:$0xff]
    %98 = vrot.lane.b32.xlu0 %v97, 2
    %v99 = vpop.permute.xlu0 %98
    %s100 = sld [smem:[#allocation2 + $0x100]]
    %v101 = vstv %s100
    %v102 = vmul.f32 %v101, %v99
    %v103 = vadd.f32 %v95, %v102
    %104 = vrot.lane.b32.xlu0 %v97, 1
    %v105 = vpop.permute.xlu0 %104
    %s106 = sld [smem:[#allocation2 + $0x101]]
    %v107 = vstv %s106
    %v108 = vmul.f32 %v107, %v105
    %v109 = vadd.f32 %v103, %v108
    %s110 = sld [smem:[#allocation2 + $0x102]]
    %v111 = vstv %s110
    %v112 = vmul.f32 %v111, %v97
    %v113 = vadd.f32 %v109, %v112
    %114 = vrot.lane.b32.xlu0 %v97, 127
    %v115 = vpop.permute.xlu0 %114
    %s116 = sld [smem:[#allocation2 + $0x103]]
    %v117 = vstv %s116
    %v118 = vmul.f32 %v117, %v115
    %v119 = vadd.f32 %v113, %v118
    %120 = vrot.lane.b32.xlu0 %v97, 126
    %v121 = vpop.permute.xlu0 %120
    %s122 = sld [smem:[#allocation2 + $0x104]]
    %v123 = vstv %s122
    %v124 = vmul.f32 %v123, %v121
    %v125 = vadd.f32 %v119, %v124
    %s126 = scalar_lea.vmem [#allocation6], 24
    %v127 = vld [vmem:[%s126] sm:$0xff]
    %128 = vrot.lane.b32.xlu0 %v127, 2
    %v129 = vpop.permute.xlu0 %128
    %s130 = sld [smem:[#allocation2 + $0x180]]
    %v131 = vstv %s130
    %v132 = vmul.f32 %v131, %v129
    %v133 = vadd.f32 %v125, %v132
    %134 = vrot.lane.b32.xlu0 %v127, 1
    %v135 = vpop.permute.xlu0 %134
    %s136 = sld [smem:[#allocation2 + $0x181]]
    %v137 = vstv %s136
    %v138 = vmul.f32 %v137, %v135
    %v139 = vadd.f32 %v133, %v138
    %s140 = sld [smem:[#allocation2 + $0x182]]
    %v141 = vstv %s140
    %v142 = vmul.f32 %v141, %v127
    %v143 = vadd.f32 %v139, %v142
    %144 = vrot.lane.b32.xlu0 %v127, 127
    %v145 = vpop.permute.xlu0 %144
    %s146 = sld [smem:[#allocation2 + $0x183]]
    %v147 = vstv %s146
    %v148 = vmul.f32 %v147, %v145
    %v149 = vadd.f32 %v143, %v148
    %150 = vrot.lane.b32.xlu0 %v127, 126
    %v151 = vpop.permute.xlu0 %150
    %s152 = sld [smem:[#allocation2 + $0x184]]
    %v153 = vstv %s152
    %v154 = vmul.f32 %v153, %v151
    %v155 = vadd.f32 %v149, %v154
    %156 = vst [vmem:[#allocation7] sm:$0xff] %v155
    // Predicated region
    $region18: #{tpu_custom_call.1} parent=1 // pred_check
      _
    $region19: #{tpu_custom_call.1} parent=1 // pred_check_branch
      %158 = sbr.rel (0) target = $region21
    $region20: #{tpu_custom_call.1} parent=1 // pred_region
      %s160 = ssub.s32 128, 128
      %161 = vsyncadd [#allocation4], %s160
      %s163 = sshll.u32 [#allocation7], 4
      %s164 = int_to_ptr.vmem [resolvable:$true] %s163
      %166 = dma.vmem_to_hbm [thread:$0]  %s164, 128, %s2, [#allocation4]
    $region21: #{tpu_custom_call.1} parent=1 // pred_fallthru
      _
    // Predicated region
    $region22: #{tpu_custom_call.1} parent=1 // pred_check
      _
    $region23: #{tpu_custom_call.1} parent=1 // pred_check_branch
      %168 = sbr.rel (0) target = $region25
    $region24: #{tpu_custom_call.1} parent=1 // pred_region
      %169 = dma.done [#allocation4], 128
    $region25: #{tpu_custom_call.1} parent=1 // pred_fallthru
      _
    %170 = vsyncpa [#allocation3], 1
    %171 = vsyncpa [#allocation4], 1
    %172 = vsyncpa [#allocation5], 1

</llo_original>
